<compile_context>
chip_gen: v5e
topology: v5e:2x2
jax: 0.10.0
libtpu: 0.0.40
codegen_flags: <defaults>
</compile_context>

<pallas_src>
import jax
import jax.numpy as jnp
from jax.experimental import pallas as pl
from jax.experimental.pallas import tpu as pltpu

NUM_FEATURES = 4
HIDDEN = 256
NUM_CLASSES = 104
PADDED_CLASSES = 128  # lane-dense output width


def _round_up(n, m):
    return ((n + m - 1) // m) * m


def _mlp_softmax_kernel(x_ref, w1_ref, b1_ref, w2_ref, b2_ref,
                        w3_ref, b3_ref, w4_ref, b4_ref, o_ref):
    # ---- layer_1 + relu (K=4: do it on the VPU as 4 broadcast FMAs) ----
    x = x_ref[...]                      # [TB, 4]  f32
    w1 = w1_ref[...]                    # [4, H]   f32
    h = (x[:, 0:1] * w1[0:1, :] + x[:, 1:2] * w1[1:2, :]
         + x[:, 2:3] * w1[2:3, :] + x[:, 3:4] * w1[3:4, :] + b1_ref[...])
    h = jnp.maximum(h, 0.0)
    # dropout -> identity (inference).  # TODO(synk): training-mode dropout.

    # ---- layer_2 + relu (bf16 MXU, f32 accumulate) ----
    h = jnp.dot(h.astype(jnp.bfloat16), w2_ref[...],
                preferred_element_type=jnp.float32)
    h = jnp.maximum(h + b2_ref[...], 0.0)

    # ---- layer_3 + relu ----
    h = jnp.dot(h.astype(jnp.bfloat16), w3_ref[...],
                preferred_element_type=jnp.float32)
    h = jnp.maximum(h + b3_ref[...], 0.0)

    # ---- layer_out + relu (output padded to 128 lanes) ----
    logits = jnp.dot(h.astype(jnp.bfloat16), w4_ref[...],
                     preferred_element_type=jnp.float32)
    logits = jnp.maximum(logits + b4_ref[...], 0.0)

    # softmax over the real class columns only.  All logits are >= 0 after the
    # ReLU, so the max over the full 128-wide padded row equals the max over
    # the real 104 columns (padded logits are exactly 0 after relu+0 bias).
    col = jax.lax.broadcasted_iota(jnp.int32, logits.shape, 1)
    valid = (col < NUM_CLASSES).astype(jnp.float32)      # [TB, 128] 0/1 mask
    m = jnp.max(logits, axis=1, keepdims=True)
    e = jnp.exp(logits - m) * valid                       # zero out padded cols
    denom = jnp.sum(e, axis=1, keepdims=True)
    o_ref[...] = (e * pl.reciprocal(denom, approx=True)).astype(o_ref.dtype)


def pytorch_multiclass_forward(x, params, *, block_b=512):
    """x: [B, NUM_FEATURES] float32. Returns [B, NUM_CLASSES] softmax probs."""
    w1, b1, w2, b2, w3, b3, w4, b4 = params
    B = x.shape[0]

    # Batch tile: multiple of 8, capped at block_b; pad batch to a tile multiple.
    tb = max(8, (min(block_b, _round_up(B, 8)) // 8) * 8)
    B_pad = _round_up(B, tb)
    if B_pad != B:
        x = jnp.pad(x, ((0, B_pad - B), (0, 0)))

    # Lane-dense output: zero-pad last layer to 128 classes.
    w4p = jnp.pad(w4, ((0, 0), (0, PADDED_CLASSES - NUM_CLASSES)))
    b4p = jnp.pad(b4, ((0, 0), (0, PADDED_CLASSES - NUM_CLASSES)))

    # Pre-cast MXU-layer weights to bf16 once (w1 stays f32 for the VPU path).
    w2b = w2.astype(jnp.bfloat16)
    w3b = w3.astype(jnp.bfloat16)
    w4b = w4p.astype(jnp.bfloat16)

    grid = (B_pad // tb,)
    const = lambda i: (0, 0)

    cost = pl.CostEstimate(
        flops=2 * B_pad * (NUM_FEATURES * HIDDEN + 2 * HIDDEN * HIDDEN
                           + HIDDEN * PADDED_CLASSES),
        transcendentals=B_pad * PADDED_CLASSES,
        bytes_accessed=(x.size * 4 + B_pad * PADDED_CLASSES * 4
                        + (w2b.size + w3b.size + w4b.size) * 2
                        + w1.size * 4
                        + (b1.size + b2.size + b3.size + b4p.size) * 4),
    )

    out = pl.pallas_call(
        _mlp_softmax_kernel,
        out_shape=jax.ShapeDtypeStruct((B_pad, PADDED_CLASSES), jnp.float32),
        grid=grid,
        in_specs=[
            pl.BlockSpec((tb, NUM_FEATURES), lambda i: (i, 0)),       # x tile
            pl.BlockSpec((NUM_FEATURES, HIDDEN), const),              # w1 (resident)
            pl.BlockSpec((1, HIDDEN), const),                         # b1
            pl.BlockSpec((HIDDEN, HIDDEN), const),                    # w2
            pl.BlockSpec((1, HIDDEN), const),                         # b2
            pl.BlockSpec((HIDDEN, HIDDEN), const),                    # w3
            pl.BlockSpec((1, HIDDEN), const),                         # b3
            pl.BlockSpec((HIDDEN, PADDED_CLASSES), const),            # w4 (padded)
            pl.BlockSpec((1, PADDED_CLASSES), const),                 # b4 (padded)
        ],
        out_specs=pl.BlockSpec((tb, PADDED_CLASSES), lambda i: (i, 0)),
        compiler_params=pltpu.CompilerParams(
            dimension_semantics=("parallel",)),
        cost_estimate=cost,
    )(x, w1, b1, w2b, b2, w3b, b3, w4b, b4p)

    return out[:B, :NUM_CLASSES]


def init_params(key):
    """Deterministic init mimicking torch Linear default (uniform ±1/sqrt(fan_in))."""
    def linear(k, fan_in, fan_out):
        kw, kb = jax.random.split(k)
        bound = 1.0 / jnp.sqrt(fan_in)
        w = jax.random.uniform(kw, (fan_in, fan_out), jnp.float32, -bound, bound)
        b = jax.random.uniform(kb, (1, fan_out), jnp.float32, -bound, bound)
        return w, b

    k1, k2, k3, k4 = jax.random.split(key, 4)
    w1, b1 = linear(k1, NUM_FEATURES, HIDDEN)
    w2, b2 = linear(k2, HIDDEN, HIDDEN)
    w3, b3 = linear(k3, HIDDEN, HIDDEN)
    w4, b4 = linear(k4, HIDDEN, NUM_CLASSES)
    return (w1, b1, w2, b2, w3, b3, w4, b4)


def reference_forward(x, params):
    """Plain-JAX f32 reference for correctness checking."""
    w1, b1, w2, b2, w3, b3, w4, b4 = params
    h = jnp.maximum(x @ w1 + b1, 0.0)
    h = jnp.maximum(h @ w2 + b2, 0.0)
    h = jnp.maximum(h @ w3 + b3, 0.0)
    logits = jnp.maximum(h @ w4 + b4, 0.0)
    return jax.nn.softmax(logits, axis=1)


if __name__ == "__main__":
    key = jax.random.PRNGKey(0)
    kx, kp = jax.random.split(key)
    params = init_params(kp)

    # Small demo batch (single tile).
    B = 8
    x = jax.random.normal(kx, (B, NUM_FEATURES), jnp.float32)
    out = jax.block_until_ready(pytorch_multiclass_forward(x, params))
    ref = reference_forward(x, params)
    assert out.shape == (B, NUM_CLASSES)
    assert jnp.allclose(jnp.sum(out, axis=1), 1.0, atol=5e-3)
    assert jnp.allclose(out, ref, atol=2e-2, rtol=0)

    # Multi-tile + batch-padding path (grid of 4, 200 -> 256 padded rows).
    B2 = 200
    x2 = jax.random.normal(jax.random.PRNGKey(1), (B2, NUM_FEATURES), jnp.float32)
    out2 = jax.block_until_ready(
        pytorch_multiclass_forward(x2, params, block_b=64))
    ref2 = reference_forward(x2, params)
    assert out2.shape == (B2, NUM_CLASSES)
    assert jnp.allclose(jnp.sum(out2, axis=1), 1.0, atol=5e-3)
    assert jnp.allclose(out2, ref2, atol=2e-2, rtol=0)

    print("KERNEL_OK")
</pallas_src>

<mosaic_0001>
module attributes {stable_mosaic.version = 11 : i64} {
  func.func @_mlp_softmax_kernel(%arg0: i32, %arg1: memref<8x4xf32, #tpu.memory_space<vmem>>, %arg2: memref<4x256xf32, #tpu.memory_space<vmem>>, %arg3: memref<1x256xf32, #tpu.memory_space<vmem>>, %arg4: memref<256x256xbf16, #tpu.memory_space<vmem>>, %arg5: memref<1x256xf32, #tpu.memory_space<vmem>>, %arg6: memref<256x256xbf16, #tpu.memory_space<vmem>>, %arg7: memref<1x256xf32, #tpu.memory_space<vmem>>, %arg8: memref<256x128xbf16, #tpu.memory_space<vmem>>, %arg9: memref<1x128xf32, #tpu.memory_space<vmem>>, %arg10: memref<8x128xf32, #tpu.memory_space<vmem>>) attributes {dimension_semantics = [#tpu.dimension_semantics<parallel>], iteration_bounds = array<i64: 1>, scalar_prefetch = 0 : i64, scratch_operands = 0 : i64, tpu.core_type = #tpu.core_type<tc>, window_params = [{transform_indices = @transform_0, window_bounds = array<i64: 8, 4>}, {pipeline_mode = #tpu.pipeline_mode<synchronous>, transform_indices = @transform_1, window_bounds = array<i64: 4, 256>}, {pipeline_mode = #tpu.pipeline_mode<synchronous>, transform_indices = @transform_2, window_bounds = array<i64: 1, 256>}, {pipeline_mode = #tpu.pipeline_mode<synchronous>, transform_indices = @transform_3, window_bounds = array<i64: 256, 256>}, {pipeline_mode = #tpu.pipeline_mode<synchronous>, transform_indices = @transform_4, window_bounds = array<i64: 1, 256>}, {pipeline_mode = #tpu.pipeline_mode<synchronous>, transform_indices = @transform_5, window_bounds = array<i64: 256, 256>}, {pipeline_mode = #tpu.pipeline_mode<synchronous>, transform_indices = @transform_6, window_bounds = array<i64: 1, 256>}, {pipeline_mode = #tpu.pipeline_mode<synchronous>, transform_indices = @transform_7, window_bounds = array<i64: 256, 128>}, {pipeline_mode = #tpu.pipeline_mode<synchronous>, transform_indices = @transform_8, window_bounds = array<i64: 1, 128>}, {transform_indices = @transform_9, window_bounds = array<i64: 8, 128>}]} {
    %c0 = arith.constant 0 : index
    %c0_0 = arith.constant 0 : index
    %0 = vector.load %arg1[%c0, %c0_0] : memref<8x4xf32, #tpu.memory_space<vmem>>, vector<8x4xf32>
    %c0_1 = arith.constant 0 : index
    %c0_2 = arith.constant 0 : index
    %1 = vector.load %arg2[%c0_1, %c0_2] : memref<4x256xf32, #tpu.memory_space<vmem>>, vector<4x256xf32>
    %2 = vector.extract_strided_slice %0 {offsets = [0, 0], sizes = [8, 1], strides = [1, 1]} : vector<8x4xf32> to vector<8x1xf32>
    %3 = vector.extract_strided_slice %1 {offsets = [0, 0], sizes = [1, 256], strides = [1, 1]} : vector<4x256xf32> to vector<1x256xf32>
    %4 = vector.broadcast %2 : vector<8x1xf32> to vector<8x256xf32>
    %5 = vector.broadcast %3 : vector<1x256xf32> to vector<8x256xf32>
    %6 = arith.mulf %4, %5 : vector<8x256xf32>
    %7 = vector.extract_strided_slice %0 {offsets = [0, 1], sizes = [8, 1], strides = [1, 1]} : vector<8x4xf32> to vector<8x1xf32>
    %8 = vector.extract_strided_slice %1 {offsets = [1, 0], sizes = [1, 256], strides = [1, 1]} : vector<4x256xf32> to vector<1x256xf32>
    %9 = vector.broadcast %7 : vector<8x1xf32> to vector<8x256xf32>
    %10 = vector.broadcast %8 : vector<1x256xf32> to vector<8x256xf32>
    %11 = arith.mulf %9, %10 : vector<8x256xf32>
    %12 = arith.addf %6, %11 : vector<8x256xf32>
    %13 = vector.extract_strided_slice %0 {offsets = [0, 2], sizes = [8, 1], strides = [1, 1]} : vector<8x4xf32> to vector<8x1xf32>
    %14 = vector.extract_strided_slice %1 {offsets = [2, 0], sizes = [1, 256], strides = [1, 1]} : vector<4x256xf32> to vector<1x256xf32>
    %15 = vector.broadcast %13 : vector<8x1xf32> to vector<8x256xf32>
    %16 = vector.broadcast %14 : vector<1x256xf32> to vector<8x256xf32>
    %17 = arith.mulf %15, %16 : vector<8x256xf32>
    %18 = arith.addf %12, %17 : vector<8x256xf32>
    %19 = vector.extract_strided_slice %0 {offsets = [0, 3], sizes = [8, 1], strides = [1, 1]} : vector<8x4xf32> to vector<8x1xf32>
    %20 = vector.extract_strided_slice %1 {offsets = [3, 0], sizes = [1, 256], strides = [1, 1]} : vector<4x256xf32> to vector<1x256xf32>
    %21 = vector.broadcast %19 : vector<8x1xf32> to vector<8x256xf32>
    %22 = vector.broadcast %20 : vector<1x256xf32> to vector<8x256xf32>
    %23 = arith.mulf %21, %22 : vector<8x256xf32>
    %24 = arith.addf %18, %23 : vector<8x256xf32>
    %c0_3 = arith.constant 0 : index
    %c0_4 = arith.constant 0 : index
    %25 = vector.load %arg3[%c0_3, %c0_4] : memref<1x256xf32, #tpu.memory_space<vmem>>, vector<1x256xf32>
    %26 = vector.broadcast %25 : vector<1x256xf32> to vector<8x256xf32>
    %27 = arith.addf %24, %26 : vector<8x256xf32>
    %cst = arith.constant 0.000000e+00 : f32
    %28 = vector.broadcast %cst : f32 to vector<8x256xf32>
    %29 = arith.maximumf %27, %28 : vector<8x256xf32>
    %30 = arith.truncf %29 : vector<8x256xf32> to vector<8x256xbf16>
    %c0_5 = arith.constant 0 : index
    %c0_6 = arith.constant 0 : index
    %31 = vector.load %arg4[%c0_5, %c0_6] : memref<256x256xbf16, #tpu.memory_space<vmem>>, vector<256x256xbf16>
    %cst_7 = arith.constant dense<0.000000e+00> : vector<8x256xf32>
    %32 = tpu.matmul %30, %31, %cst_7 {dimension_numbers = #tpu.dot_dimension_numbers<[1], [0], [0], [1], [0, 0, 1, 1], [], []>} : vector<8x256xbf16>, vector<256x256xbf16>, vector<8x256xf32> -> vector<8x256xf32>
    %c0_8 = arith.constant 0 : index
    %c0_9 = arith.constant 0 : index
    %33 = vector.load %arg5[%c0_8, %c0_9] : memref<1x256xf32, #tpu.memory_space<vmem>>, vector<1x256xf32>
    %34 = vector.broadcast %33 : vector<1x256xf32> to vector<8x256xf32>
    %35 = arith.addf %32, %34 : vector<8x256xf32>
    %cst_10 = arith.constant 0.000000e+00 : f32
    %36 = vector.broadcast %cst_10 : f32 to vector<8x256xf32>
    %37 = arith.maximumf %35, %36 : vector<8x256xf32>
    %38 = arith.truncf %37 : vector<8x256xf32> to vector<8x256xbf16>
    %c0_11 = arith.constant 0 : index
    %c0_12 = arith.constant 0 : index
    %39 = vector.load %arg6[%c0_11, %c0_12] : memref<256x256xbf16, #tpu.memory_space<vmem>>, vector<256x256xbf16>
    %cst_13 = arith.constant dense<0.000000e+00> : vector<8x256xf32>
    %40 = tpu.matmul %38, %39, %cst_13 {dimension_numbers = #tpu.dot_dimension_numbers<[1], [0], [0], [1], [0, 0, 1, 1], [], []>} : vector<8x256xbf16>, vector<256x256xbf16>, vector<8x256xf32> -> vector<8x256xf32>
    %c0_14 = arith.constant 0 : index
    %c0_15 = arith.constant 0 : index
    %41 = vector.load %arg7[%c0_14, %c0_15] : memref<1x256xf32, #tpu.memory_space<vmem>>, vector<1x256xf32>
    %42 = vector.broadcast %41 : vector<1x256xf32> to vector<8x256xf32>
    %43 = arith.addf %40, %42 : vector<8x256xf32>
    %cst_16 = arith.constant 0.000000e+00 : f32
    %44 = vector.broadcast %cst_16 : f32 to vector<8x256xf32>
    %45 = arith.maximumf %43, %44 : vector<8x256xf32>
    %46 = arith.truncf %45 : vector<8x256xf32> to vector<8x256xbf16>
    %c0_17 = arith.constant 0 : index
    %c0_18 = arith.constant 0 : index
    %47 = vector.load %arg8[%c0_17, %c0_18] : memref<256x128xbf16, #tpu.memory_space<vmem>>, vector<256x128xbf16>
    %cst_19 = arith.constant dense<0.000000e+00> : vector<8x128xf32>
    %48 = tpu.matmul %46, %47, %cst_19 {dimension_numbers = #tpu.dot_dimension_numbers<[1], [0], [0], [1], [0, 0, 1, 1], [], []>} : vector<8x256xbf16>, vector<256x128xbf16>, vector<8x128xf32> -> vector<8x128xf32>
    %c0_20 = arith.constant 0 : index
    %c0_21 = arith.constant 0 : index
    %49 = vector.load %arg9[%c0_20, %c0_21] : memref<1x128xf32, #tpu.memory_space<vmem>>, vector<1x128xf32>
    %50 = vector.broadcast %49 : vector<1x128xf32> to vector<8x128xf32>
    %51 = arith.addf %48, %50 : vector<8x128xf32>
    %cst_22 = arith.constant 0.000000e+00 : f32
    %52 = vector.broadcast %cst_22 : f32 to vector<8x128xf32>
    %53 = arith.maximumf %51, %52 : vector<8x128xf32>
    %54 = tpu.iota {dimensions = array<i32: 1>} : vector<8x128xi32>
    %c104_i32 = arith.constant 104 : i32
    %55 = vector.broadcast %c104_i32 : i32 to vector<8x128xi32>
    %56 = arith.cmpi slt, %54, %55 : vector<8x128xi32>
    %57 = arith.extui %56 : vector<8x128xi1> to vector<8x128xi32>
    %58 = arith.sitofp %57 : vector<8x128xi32> to vector<8x128xf32>
    %cst_23 = arith.constant dense<0xFF800000> : vector<8xf32>
    %59 = vector.multi_reduction <maximumf>, %53, %cst_23 [1] : vector<8x128xf32> to vector<8xf32>
    %60 = vector.shape_cast %59 : vector<8xf32> to vector<8x1xf32>
    %61 = vector.broadcast %60 : vector<8x1xf32> to vector<8x128xf32>
    %62 = arith.subf %53, %61 : vector<8x128xf32>
    %63 = math.exp %62 : vector<8x128xf32>
    %64 = arith.mulf %63, %58 : vector<8x128xf32>
    %cst_24 = arith.constant dense<0.000000e+00> : vector<8xf32>
    %65 = vector.multi_reduction <add>, %64, %cst_24 [1] : vector<8x128xf32> to vector<8xf32>
    %66 = vector.shape_cast %65 : vector<8xf32> to vector<8x1xf32>
    %67 = tpu.reciprocal %66 {approx = true} : vector<8x1xf32> -> vector<8x1xf32>
    %68 = vector.broadcast %67 : vector<8x1xf32> to vector<8x128xf32>
    %69 = arith.mulf %64, %68 : vector<8x128xf32>
    %c0_25 = arith.constant 0 : index
    %c0_26 = arith.constant 0 : index
    %70 = vector.load %arg10[%c0_25, %c0_26] : memref<8x128xf32, #tpu.memory_space<vmem>>, vector<8x128xf32>
    tpu.vector_store %arg10[%c0_25, %c0_26], %69 {strides = array<i32>} : memref<8x128xf32, #tpu.memory_space<vmem>>, vector<8x128xf32>,
    return
  }
  func.func @transform_0(%arg0: i32) -> (i32, i32) {
    %c0_i32 = arith.constant 0 : i32
    %c0_i32_0 = arith.constant 0 : i32
    return %arg0, %c0_i32 : i32, i32
  }
  func.func @transform_1(%arg0: i32) -> (i32, i32) {
    %c0_i32 = arith.constant 0 : i32
    %c0_i32_0 = arith.constant 0 : i32
    %c0_i32_1 = arith.constant 0 : i32
    return %c0_i32, %c0_i32_0 : i32, i32
  }
  func.func @transform_2(%arg0: i32) -> (i32, i32) {
    %c0_i32 = arith.constant 0 : i32
    %c0_i32_0 = arith.constant 0 : i32
    %c0_i32_1 = arith.constant 0 : i32
    return %c0_i32, %c0_i32_0 : i32, i32
  }
  func.func @transform_3(%arg0: i32) -> (i32, i32) {
    %c0_i32 = arith.constant 0 : i32
    %c0_i32_0 = arith.constant 0 : i32
    %c0_i32_1 = arith.constant 0 : i32
    return %c0_i32, %c0_i32_0 : i32, i32
  }
  func.func @transform_4(%arg0: i32) -> (i32, i32) {
    %c0_i32 = arith.constant 0 : i32
    %c0_i32_0 = arith.constant 0 : i32
    %c0_i32_1 = arith.constant 0 : i32
    return %c0_i32, %c0_i32_0 : i32, i32
  }
  func.func @transform_5(%arg0: i32) -> (i32, i32) {
    %c0_i32 = arith.constant 0 : i32
    %c0_i32_0 = arith.constant 0 : i32
    %c0_i32_1 = arith.constant 0 : i32
    return %c0_i32, %c0_i32_0 : i32, i32
  }
  func.func @transform_6(%arg0: i32) -> (i32, i32) {
    %c0_i32 = arith.constant 0 : i32
    %c0_i32_0 = arith.constant 0 : i32
    %c0_i32_1 = arith.constant 0 : i32
    return %c0_i32, %c0_i32_0 : i32, i32
  }
  func.func @transform_7(%arg0: i32) -> (i32, i32) {
    %c0_i32 = arith.constant 0 : i32
    %c0_i32_0 = arith.constant 0 : i32
    %c0_i32_1 = arith.constant 0 : i32
    return %c0_i32, %c0_i32_0 : i32, i32
  }
  func.func @transform_8(%arg0: i32) -> (i32, i32) {
    %c0_i32 = arith.constant 0 : i32
    %c0_i32_0 = arith.constant 0 : i32
    %c0_i32_1 = arith.constant 0 : i32
    return %c0_i32, %c0_i32_0 : i32, i32
  }
  func.func @transform_9(%arg0: i32) -> (i32, i32) {
    %c0_i32 = arith.constant 0 : i32
    %c0_i32_0 = arith.constant 0 : i32
    return %arg0, %c0_i32 : i32, i32
  }
}

</mosaic_0001>

<llo_original>
// kernel: tpu_custom_call.1
$region0: #{tpu_custom_call.1}
  #allocation0 [shape = 'u32[]', space=smem, size = 0x4, offset = 0x4, fixed_abs, tag = 'smem constant byte address 0x4 - core index']
  #allocation1 [shape = 'u32[72,128]{1,0:T(1,128)}', space=vmem, size = 0x9000, scoped, tag = 'internal scratch']
  %s0 = inlined_call_operand.vmem [shape: f32[8,4], index: 0, kind: input, shape index: {}]
  %s1 = inlined_call_operand.vmem [shape: f32[4,256], index: 1, kind: input, shape index: {}]
  %s2 = inlined_call_operand.vmem [shape: f32[1,256], index: 2, kind: input, shape index: {}]
  %s3 = inlined_call_operand.hbm [shape: bf16[256,256], index: 3, kind: input, shape index: {}]
  %s4 = inlined_call_operand.vmem [shape: f32[1,256], index: 4, kind: input, shape index: {}]
  %s5 = inlined_call_operand.hbm [shape: bf16[256,256], index: 5, kind: input, shape index: {}]
  %s6 = inlined_call_operand.vmem [shape: f32[1,256], index: 6, kind: input, shape index: {}]
  %s7 = inlined_call_operand.hbm [shape: bf16[256,128], index: 7, kind: input, shape index: {}]
  %s8 = inlined_call_operand.vmem [shape: f32[1,128], index: 8, kind: input, shape index: {}]
  %s9 = inlined_call_operand.hbm [shape: f32[8,128], index: 9, kind: output, shape index: {}]
  %s10 = sld [smem:[#allocation0]]
  $region58: #{tpu_custom_call.1} parent=0
    _
  %s12 = ssub.s32 1, %s10
  %s13 = scalar_select 0, %s12, %s10
  $region1: #{tpu_custom_call.1} parent=0
    #allocation2 [shape = 'u8[131072]{0}', space=vmem, size = 0x20000, scoped, tag = 'input window, operand 3, single buffered']
    #allocation3 [shape = 's32[1]{0}', space=sflag, size = 0x4, scoped, tag = 'scoped memory for tpu_custom_call.1']
    #allocation4 [shape = 's32[1]{0}', space=sflag, size = 0x4, scoped, tag = 'scoped memory for tpu_custom_call.1']
    #allocation5 [shape = 'u8[131072]{0}', space=vmem, size = 0x20000, scoped, tag = 'input window, operand 5, single buffered']
    #allocation6 [shape = 's32[1]{0}', space=sflag, size = 0x4, scoped, tag = 'scoped memory for tpu_custom_call.1']
    #allocation7 [shape = 'u8[65536]{0}', space=vmem, size = 0x10000, scoped, tag = 'input window, operand 7, single buffered']
    #allocation8 [shape = 'u8[4096]{0}', space=vmem, size = 0x1000, scoped, tag = 'output window, operand 0, single buffered']
    %14 = vsyncpa [#allocation3], 0
    %15 = vsyncpa [#allocation6], 0
    %16 = vsyncpa [#allocation4], 0
    // Predicated region
    $region2: #{tpu_custom_call.1} parent=1 // pred_check
      _
    $region3: #{tpu_custom_call.1} parent=1 // pred_check_branch
      %18 = sbr.rel (0) target = $region5
    $region4: #{tpu_custom_call.1} parent=1 // pred_region
      _
    $region5: #{tpu_custom_call.1} parent=1 // pred_fallthru
      _
    // Predicated region
    $region6: #{tpu_custom_call.1} parent=1 // pred_check
      _
    $region7: #{tpu_custom_call.1} parent=1 // pred_check_branch
      %20 = sbr.rel (0) target = $region9
    $region8: #{tpu_custom_call.1} parent=1 // pred_region
      _
    $region9: #{tpu_custom_call.1} parent=1 // pred_fallthru
      _
    // Predicated region
    $region10: #{tpu_custom_call.1} parent=1 // pred_check
      _
    $region11: #{tpu_custom_call.1} parent=1 // pred_check_branch
      %22 = sbr.rel (0) target = $region13
    $region12: #{tpu_custom_call.1} parent=1 // pred_region
      _
    $region13: #{tpu_custom_call.1} parent=1 // pred_fallthru
      _
    // Predicated region
    $region14: #{tpu_custom_call.1} parent=1 // pred_check
      _
    $region15: #{tpu_custom_call.1} parent=1 // pred_check_branch
      %24 = sbr.rel (0) target = $region17
    $region16: #{tpu_custom_call.1} parent=1 // pred_region
      %26 = vsyncadd [#allocation3], 0
      %s27 = sshll.u32 %s3, 4
      %s28 = int_to_ptr.hbm [resolvable:$true] %s27
      %s29 = sshll.u32 [#allocation2], 4
      %s30 = int_to_ptr.vmem [resolvable:$true] %s29
      %35 = dma.hbm_to_vmem [thread:$0]  %s28, 4096, %s30, [#allocation3], 128, 128, 8
    $region17: #{tpu_custom_call.1} parent=1 // pred_fallthru
      _
    // Predicated region
    $region18: #{tpu_custom_call.1} parent=1 // pred_check
      _
    $region19: #{tpu_custom_call.1} parent=1 // pred_check_branch
      %37 = sbr.rel (0) target = $region21
    $region20: #{tpu_custom_call.1} parent=1 // pred_region
      _
    $region21: #{tpu_custom_call.1} parent=1 // pred_fallthru
      _
    // Predicated region
    $region22: #{tpu_custom_call.1} parent=1 // pred_check
      _
    $region23: #{tpu_custom_call.1} parent=1 // pred_check_branch
      %39 = sbr.rel (0) target = $region25
    $region24: #{tpu_custom_call.1} parent=1 // pred_region
      %41 = vsyncadd [#allocation6], 0
      %s42 = sshll.u32 %s5, 4
      %s43 = int_to_ptr.hbm [resolvable:$true] %s42
      %s44 = sshll.u32 [#allocation5], 4
      %s45 = int_to_ptr.vmem [resolvable:$true] %s44
      %50 = dma.hbm_to_vmem [thread:$0]  %s43, 4096, %s45, [#allocation6], 128, 128, 8
    $region25: #{tpu_custom_call.1} parent=1 // pred_fallthru
      _
    // Predicated region
    $region26: #{tpu_custom_call.1} parent=1 // pred_check
      _
    $region27: #{tpu_custom_call.1} parent=1 // pred_check_branch
      %52 = sbr.rel (0) target = $region29
    $region28: #{tpu_custom_call.1} parent=1 // pred_region
      _
    $region29: #{tpu_custom_call.1} parent=1 // pred_fallthru
      _
    // Predicated region
    $region30: #{tpu_custom_call.1} parent=1 // pred_check
      _
    $region31: #{tpu_custom_call.1} parent=1 // pred_check_branch
      %54 = sbr.rel (0) target = $region33
    $region32: #{tpu_custom_call.1} parent=1 // pred_region
      %56 = vsyncadd [#allocation6], 0
      %s57 = sshll.u32 %s7, 4
      %s58 = int_to_ptr.hbm [resolvable:$true] %s57
      %s59 = sshll.u32 [#allocation7], 4
      %s60 = int_to_ptr.vmem [resolvable:$true] %s59
      %65 = dma.hbm_to_vmem [thread:$0]  %s58, 2048, %s60, [#allocation6], 64, 64, 4
    $region33: #{tpu_custom_call.1} parent=1 // pred_fallthru
      _
    // Predicated region
    $region34: #{tpu_custom_call.1} parent=1 // pred_check
      _
    $region35: #{tpu_custom_call.1} parent=1 // pred_check_branch
      %67 = sbr.rel (0) target = $region37
    $region36: #{tpu_custom_call.1} parent=1 // pred_region
      _
    $region37: #{tpu_custom_call.1} parent=1 // pred_fallthru
      _
    // Predicated region
    $region38: #{tpu_custom_call.1} parent=1 // pred_check
      _
    $region39: #{tpu_custom_call.1} parent=1 // pred_check_branch
      %69 = sbr.rel (0) target = $region41
    $region40: #{tpu_custom_call.1} parent=1 // pred_region
      %71 = dma.done [#allocation3], 4096
    $region41: #{tpu_custom_call.1} parent=1 // pred_fallthru
      _
    // Predicated region
    $region42: #{tpu_custom_call.1} parent=1 // pred_check
      _
    $region43: #{tpu_custom_call.1} parent=1 // pred_check_branch
      %73 = sbr.rel (0) target = $region45
    $region44: #{tpu_custom_call.1} parent=1 // pred_region
      %75 = dma.done [#allocation6], 4096
    $region45: #{tpu_custom_call.1} parent=1 // pred_fallthru
      _
    // Predicated region
    $region46: #{tpu_custom_call.1} parent=1 // pred_check
      _
    $region47: #{tpu_custom_call.1} parent=1 // pred_check_branch
      %77 = sbr.rel (0) target = $region49
    $region48: #{tpu_custom_call.1} parent=1 // pred_region
      %79 = dma.done [#allocation6], 2048
    $region49: #{tpu_custom_call.1} parent=1 // pred_fallthru
      _
    %v80 = vld [vmem:[%s0] sm:$0xff]
    %v81 = vld [vmem:[%s1] sm:$0xff]
    %83 = vset.pattern.permute.xlu0 0
    %84 = vperm.xlu0 %83, %v80
    %v85 = vpop.permute.xlu0 %84
    %v88 = vperm.slane %v81, 0
    %v89 = vperm.slane %v81, 4
    %v92 = vperm.slane %v88, 0
    %v93 = vperm.slane %v89, 0
    %v94 = vmul.f32 %v85, %v92
    %v95 = vmul.f32 %v85, %v93
    %96 = vset.pattern.permute.xlu0 1
    %97 = vperm.xlu0 %96, %v80
    %v98 = vpop.permute.xlu0 %97
    %v100 = vperm.slane %v81, 1
    %v101 = vperm.slane %v81, 5
    %v104 = vperm.slane %v100, 1
    %v105 = vperm.slane %v101, 1
    %v106 = vmul.f32 %v98, %v104
    %v107 = vmul.f32 %v98, %v105
    %v108 = vadd.f32 %v94, %v106
    %v109 = vadd.f32 %v95, %v107
    %110 = vset.pattern.permute.xlu0 2
    %111 = vperm.xlu0 %110, %v80
    %v112 = vpop.permute.xlu0 %111
    %v114 = vperm.slane %v81, 2
    %v115 = vperm.slane %v81, 6
    %v118 = vperm.slane %v114, 2
    %v119 = vperm.slane %v115, 2
    %v120 = vmul.f32 %v112, %v118
    %v121 = vmul.f32 %v112, %v119
    %v122 = vadd.f32 %v108, %v120
    %v123 = vadd.f32 %v109, %v121
    %124 = vset.pattern.permute.xlu0 3
    %125 = vperm.xlu0 %124, %v80
    %v126 = vpop.permute.xlu0 %125
    %v128 = vperm.slane %v81, 3
    %v129 = vperm.slane %v81, 7
    %v132 = vperm.slane %v128, 3
    %v133 = vperm.slane %v129, 3
    %v134 = vmul.f32 %v126, %v132
    %v135 = vmul.f32 %v126, %v133
    %v136 = vadd.f32 %v122, %v134
    %v137 = vadd.f32 %v123, %v135
    %v138 = vld [vmem:[%s2] sm:$0x3]
    %v140 = vperm.slane %v138, 0
    %v141 = vperm.slane %v138, 1
    %v144 = vadd.f32 %v136, %v140
    %v145 = vadd.f32 %v137, %v141
    %v146 = vmax.f32 %v144, 0.0
    %v147 = vmax.f32 %v145, 0.0
    %v148 = vpack.c.bf16 %v146, %v146
    %v149 = vpack.c.bf16 %v147, %v147
    %v150 = vld [vmem:[#allocation2] sm:$0xff]
    %v151 = vld [vmem:[#allocation2 + $0x8] sm:$0xff]
    %v152 = vld [vmem:[#allocation2 + $0x10] sm:$0xff]
    %v153 = vld [vmem:[#allocation2 + $0x18] sm:$0xff]
    %v154 = vld [vmem:[#allocation2 + $0x20] sm:$0xff]
    %v155 = vld [vmem:[#allocation2 + $0x28] sm:$0xff]
    %v156 = vld [vmem:[#allocation2 + $0x30] sm:$0xff]
    %v157 = vld [vmem:[#allocation2 + $0x38] sm:$0xff]
    %v158 = vld [vmem:[#allocation2 + $0x40] sm:$0xff]
    %v159 = vld [vmem:[#allocation2 + $0x48] sm:$0xff]
    %v160 = vld [vmem:[#allocation2 + $0x50] sm:$0xff]
    %v161 = vld [vmem:[#allocation2 + $0x58] sm:$0xff]
    %v162 = vld [vmem:[#allocation2 + $0x60] sm:$0xff]
    %v163 = vld [vmem:[#allocation2 + $0x68] sm:$0xff]
    %v164 = vld [vmem:[#allocation2 + $0x70] sm:$0xff]
    %v165 = vld [vmem:[#allocation2 + $0x78] sm:$0xff]
    %v166 = vld [vmem:[#allocation2 + $0x80] sm:$0xff]
    %v167 = vld [vmem:[#allocation2 + $0x88] sm:$0xff]
    %v168 = vld [vmem:[#allocation2 + $0x90] sm:$0xff]
    %v169 = vld [vmem:[#allocation2 + $0x98] sm:$0xff]
    %v170 = vld [vmem:[#allocation2 + $0xa0] sm:$0xff]
    %v171 = vld [vmem:[#allocation2 + $0xa8] sm:$0xff]
    %v172 = vld [vmem:[#allocation2 + $0xb0] sm:$0xff]
    %v173 = vld [vmem:[#allocation2 + $0xb8] sm:$0xff]
    %v174 = vld [vmem:[#allocation2 + $0xc0] sm:$0xff]
    %v175 = vld [vmem:[#allocation2 + $0xc8] sm:$0xff]
    %v176 = vld [vmem:[#allocation2 + $0xd0] sm:$0xff]
    %v177 = vld [vmem:[#allocation2 + $0xd8] sm:$0xff]
    %v178 = vld [vmem:[#allocation2 + $0xe0] sm:$0xff]
    %v179 = vld [vmem:[#allocation2 + $0xe8] sm:$0xff]
    %v180 = vld [vmem:[#allocation2 + $0xf0] sm:$0xff]
    %v181 = vld [vmem:[#allocation2 + $0xf8] sm:$0xff]
    %v182 = vld [vmem:[%s4] sm:$0x3]
    %v184 = vperm.slane %v182, 0
    %v185 = vperm.slane %v182, 1
    %v220 = vunpack.c.l.b16 %v150
    %v221 = vunpack.c.h.b16 %v150
    %v222 = vunpack.c.l.b16 %v151
    %v223 = vunpack.c.h.b16 %v151
    %v224 = vunpack.c.l.b16 %v152
    %v225 = vunpack.c.h.b16 %v152
    %v226 = vunpack.c.l.b16 %v153
    %v227 = vunpack.c.h.b16 %v153
    %v228 = vunpack.c.l.b16 %v154
    %v229 = vunpack.c.h.b16 %v154
    %v230 = vunpack.c.l.b16 %v155
    %v231 = vunpack.c.h.b16 %v155
    %v232 = vunpack.c.l.b16 %v156
    %v233 = vunpack.c.h.b16 %v156
    %v234 = vunpack.c.l.b16 %v157
    %v235 = vunpack.c.h.b16 %v157
    %v236 = vunpack.c.l.b16 %v158
    %v237 = vunpack.c.h.b16 %v158
    %v238 = vunpack.c.l.b16 %v159
    %v239 = vunpack.c.h.b16 %v159
    %v240 = vunpack.c.l.b16 %v160
    %v241 = vunpack.c.h.b16 %v160
    %v242 = vunpack.c.l.b16 %v161
    %v243 = vunpack.c.h.b16 %v161
    %v244 = vunpack.c.l.b16 %v162
    %v245 = vunpack.c.h.b16 %v162
    %v246 = vunpack.c.l.b16 %v163
    %v247 = vunpack.c.h.b16 %v163
    %v248 = vunpack.c.l.b16 %v164
    %v249 = vunpack.c.h.b16 %v164
    %v250 = vunpack.c.l.b16 %v165
    %v251 = vunpack.c.h.b16 %v165
    %v252 = vunpack.c.l.b16 %v166
    %v253 = vunpack.c.h.b16 %v166
    %v254 = vunpack.c.l.b16 %v167
    %v255 = vunpack.c.h.b16 %v167
    %v256 = vunpack.c.l.b16 %v168
    %v257 = vunpack.c.h.b16 %v168
    %v258 = vunpack.c.l.b16 %v169
    %v259 = vunpack.c.h.b16 %v169
    %v260 = vunpack.c.l.b16 %v170
    %v261 = vunpack.c.h.b16 %v170
    %v262 = vunpack.c.l.b16 %v171
    %v263 = vunpack.c.h.b16 %v171
    %v264 = vunpack.c.l.b16 %v172
    %v265 = vunpack.c.h.b16 %v172
    %v266 = vunpack.c.l.b16 %v173
    %v267 = vunpack.c.h.b16 %v173
    %v268 = vunpack.c.l.b16 %v174
    %v269 = vunpack.c.h.b16 %v174
    %v270 = vunpack.c.l.b16 %v175
    %v271 = vunpack.c.h.b16 %v175
    %v272 = vunpack.c.l.b16 %v176
    %v273 = vunpack.c.h.b16 %v176
    %v274 = vunpack.c.l.b16 %v177
    %v275 = vunpack.c.h.b16 %v177
    %v276 = vunpack.c.l.b16 %v178
    %v277 = vunpack.c.h.b16 %v178
    %v278 = vunpack.c.l.b16 %v179
    %v279 = vunpack.c.h.b16 %v179
    %v280 = vunpack.c.l.b16 %v180
    %v281 = vunpack.c.h.b16 %v180
    %v282 = vunpack.c.l.b16 %v181
    %v283 = vunpack.c.h.b16 %v181
    %v284 = vpack.c.b16 %v222, %v220
    %v285 = vpack.c.b16 %v223, %v221
    %v286 = vpack.c.b16 %v226, %v224
    %v287 = vpack.c.b16 %v227, %v225
    %v288 = vpack.c.b16 %v230, %v228
    %v289 = vpack.c.b16 %v231, %v229
    %v290 = vpack.c.b16 %v234, %v232
    %v291 = vpack.c.b16 %v235, %v233
    %v292 = vpack.c.b16 %v238, %v236
    %v293 = vpack.c.b16 %v239, %v237
    %v294 = vpack.c.b16 %v242, %v240
    %v295 = vpack.c.b16 %v243, %v241
    %v296 = vpack.c.b16 %v246, %v244
    %v297 = vpack.c.b16 %v247, %v245
    %v298 = vpack.c.b16 %v250, %v248
    %v299 = vpack.c.b16 %v251, %v249
    %v300 = vpack.c.b16 %v254, %v252
    %v301 = vpack.c.b16 %v255, %v253
    %v302 = vpack.c.b16 %v258, %v256
    %v303 = vpack.c.b16 %v259, %v257
    %v304 = vpack.c.b16 %v262, %v260
    %v305 = vpack.c.b16 %v263, %v261
    %v306 = vpack.c.b16 %v266, %v264
    %v307 = vpack.c.b16 %v267, %v265
    %v308 = vpack.c.b16 %v270, %v268
    %v309 = vpack.c.b16 %v271, %v269
    %v310 = vpack.c.b16 %v274, %v272
    %v311 = vpack.c.b16 %v275, %v273
    %v312 = vpack.c.b16 %v278, %v276
    %v313 = vpack.c.b16 %v279, %v277
    %v314 = vpack.c.b16 %v282, %v280
    %v315 = vpack.c.b16 %v283, %v281
    %348 = vmatpush.bf16.msra.mxu0 %v298
    %349 = vmatpush.bf16.msra.mxu0 %v296
    %350 = vmatpush.bf16.msra.mxu0 %v294
    %351 = vmatpush.bf16.msra.mxu0 %v292
    %352 = vmatpush.bf16.msra.mxu0 %v290
    %353 = vmatpush.bf16.msra.mxu0 %v288
    %354 = vmatpush.bf16.msra.mxu0 %v286
    %355 = vmatpush.bf16.msra.mxu0 %v284
    %356 = vmatmul.bf16.gmra.mxu0 %v148
    %v357 = vpop.f32.mrf.mxu0
    %v358 = vadd.f32 %v184, %v357
    %v359 = vpop.f32.mrf.mxu0
    %360 = vdwg.mxu0
    %361 = vmatpush.bf16.msra.mxu0 %v314
    %362 = vmatpush.bf16.msra.mxu0 %v312
    %363 = vmatpush.bf16.msra.mxu0 %v310
    %364 = vmatpush.bf16.msra.mxu0 %v308
    %365 = vmatpush.bf16.msra.mxu0 %v306
    %366 = vmatpush.bf16.msra.mxu0 %v304
    %367 = vmatpush.bf16.msra.mxu0 %v302
    %368 = vmatpush.bf16.msra.mxu0 %v300
    %369 = vmatmul.bf16.gmra.mxu0 %v149
    %v370 = vpop.f32.mrf.mxu0
    %v371 = vadd.f32 %v358, %v370
    %v372 = vpop.f32.mrf.mxu0
    %373 = vdwg.mxu0
    %374 = vmatpush.bf16.msra.mxu0 %v299
    %375 = vmatpush.bf16.msra.mxu0 %v297
    %376 = vmatpush.bf16.msra.mxu0 %v295
    %377 = vmatpush.bf16.msra.mxu0 %v293
    %378 = vmatpush.bf16.msra.mxu0 %v291
    %379 = vmatpush.bf16.msra.mxu0 %v289
    %380 = vmatpush.bf16.msra.mxu0 %v287
    %381 = vmatpush.bf16.msra.mxu0 %v285
    %382 = vmatmul.bf16.gmra.mxu0 %v148
    %v383 = vpop.f32.mrf.mxu0
    %v384 = vadd.f32 %v185, %v383
    %v385 = vpop.f32.mrf.mxu0
    %386 = vdwg.mxu0
    %387 = vmatpush.bf16.msra.mxu0 %v315
    %388 = vmatpush.bf16.msra.mxu0 %v313
    %389 = vmatpush.bf16.msra.mxu0 %v311
    %390 = vmatpush.bf16.msra.mxu0 %v309
    %391 = vmatpush.bf16.msra.mxu0 %v307
    %392 = vmatpush.bf16.msra.mxu0 %v305
    %393 = vmatpush.bf16.msra.mxu0 %v303
    %394 = vmatpush.bf16.msra.mxu0 %v301
    %395 = vmatmul.bf16.gmra.mxu0 %v149
    %v396 = vpop.f32.mrf.mxu0
    %v397 = vadd.f32 %v384, %v396
    %v398 = vpop.f32.mrf.mxu0
    %399 = vdwg.mxu0
    %v400 = vmax.f32 %v371, 0.0
    %v401 = vmax.f32 %v397, 0.0
    %v402 = vpack.c.bf16 %v400, %v400
    %v403 = vpack.c.bf16 %v401, %v401
    %v404 = vld [vmem:[#allocation5] sm:$0xff]
    %v405 = vld [vmem:[#allocation5 + $0x8] sm:$0xff]
    %v406 = vld [vmem:[#allocation5 + $0x10] sm:$0xff]
    %v407 = vld [vmem:[#allocation5 + $0x18] sm:$0xff]
    %v408 = vld [vmem:[#allocation5 + $0x20] sm:$0xff]
    %v409 = vld [vmem:[#allocation5 + $0x28] sm:$0xff]
    %v410 = vld [vmem:[#allocation5 + $0x30] sm:$0xff]
    %v411 = vld [vmem:[#allocation5 + $0x38] sm:$0xff]
    %v412 = vld [vmem:[#allocation5 + $0x40] sm:$0xff]
    %v413 = vld [vmem:[#allocation5 + $0x48] sm:$0xff]
    %v414 = vld [vmem:[#allocation5 + $0x50] sm:$0xff]
    %v415 = vld [vmem:[#allocation5 + $0x58] sm:$0xff]
    %v416 = vld [vmem:[#allocation5 + $0x60] sm:$0xff]
    %v417 = vld [vmem:[#allocation5 + $0x68] sm:$0xff]
    %v418 = vld [vmem:[#allocation5 + $0x70] sm:$0xff]
    %v419 = vld [vmem:[#allocation5 + $0x78] sm:$0xff]
    %v420 = vld [vmem:[#allocation5 + $0x80] sm:$0xff]
    %v421 = vld [vmem:[#allocation5 + $0x88] sm:$0xff]
    %v422 = vld [vmem:[#allocation5 + $0x90] sm:$0xff]
    %v423 = vld [vmem:[#allocation5 + $0x98] sm:$0xff]
    %v424 = vld [vmem:[#allocation5 + $0xa0] sm:$0xff]
    %v425 = vld [vmem:[#allocation5 + $0xa8] sm:$0xff]
    %v426 = vld [vmem:[#allocation5 + $0xb0] sm:$0xff]
    %v427 = vld [vmem:[#allocation5 + $0xb8] sm:$0xff]
    %v428 = vld [vmem:[#allocation5 + $0xc0] sm:$0xff]
    %v429 = vld [vmem:[#allocation5 + $0xc8] sm:$0xff]
    %v430 = vld [vmem:[#allocation5 + $0xd0] sm:$0xff]
    %v431 = vld [vmem:[#allocation5 + $0xd8] sm:$0xff]
    %v432 = vld [vmem:[#allocation5 + $0xe0] sm:$0xff]
    %v433 = vld [vmem:[#allocation5 + $0xe8] sm:$0xff]
    %v434 = vld [vmem:[#allocation5 + $0xf0] sm:$0xff]
    %v435 = vld [vmem:[#allocation5 + $0xf8] sm:$0xff]
    %v436 = vld [vmem:[%s6] sm:$0x3]
    %v438 = vperm.slane %v436, 0
    %v439 = vperm.slane %v436, 1
    %v474 = vunpack.c.l.b16 %v404
    %v475 = vunpack.c.h.b16 %v404
    %v476 = vunpack.c.l.b16 %v405
    %v477 = vunpack.c.h.b16 %v405
    %v478 = vunpack.c.l.b16 %v406
    %v479 = vunpack.c.h.b16 %v406
    %v480 = vunpack.c.l.b16 %v407
    %v481 = vunpack.c.h.b16 %v407
    %v482 = vunpack.c.l.b16 %v408
    %v483 = vunpack.c.h.b16 %v408
    %v484 = vunpack.c.l.b16 %v409
    %v485 = vunpack.c.h.b16 %v409
    %v486 = vunpack.c.l.b16 %v410
    %v487 = vunpack.c.h.b16 %v410
    %v488 = vunpack.c.l.b16 %v411
    %v489 = vunpack.c.h.b16 %v411
    %v490 = vunpack.c.l.b16 %v412
    %v491 = vunpack.c.h.b16 %v412
    %v492 = vunpack.c.l.b16 %v413
    %v493 = vunpack.c.h.b16 %v413
    %v494 = vunpack.c.l.b16 %v414
    %v495 = vunpack.c.h.b16 %v414
    %v496 = vunpack.c.l.b16 %v415
    %v497 = vunpack.c.h.b16 %v415
    %v498 = vunpack.c.l.b16 %v416
    %v499 = vunpack.c.h.b16 %v416
    %v500 = vunpack.c.l.b16 %v417
    %v501 = vunpack.c.h.b16 %v417
    %v502 = vunpack.c.l.b16 %v418
    %v503 = vunpack.c.h.b16 %v418
    %v504 = vunpack.c.l.b16 %v419
    %v505 = vunpack.c.h.b16 %v419
    %v506 = vunpack.c.l.b16 %v420
    %v507 = vunpack.c.h.b16 %v420
    %v508 = vunpack.c.l.b16 %v421
    %v509 = vunpack.c.h.b16 %v421
    %v510 = vunpack.c.l.b16 %v422
    %v511 = vunpack.c.h.b16 %v422
    %v512 = vunpack.c.l.b16 %v423
    %v513 = vunpack.c.h.b16 %v423
    %v514 = vunpack.c.l.b16 %v424
    %v515 = vunpack.c.h.b16 %v424
    %v516 = vunpack.c.l.b16 %v425
    %v517 = vunpack.c.h.b16 %v425
    %v518 = vunpack.c.l.b16 %v426
    %v519 = vunpack.c.h.b16 %v426
    %v520 = vunpack.c.l.b16 %v427
    %v521 = vunpack.c.h.b16 %v427
    %v522 = vunpack.c.l.b16 %v428
    %v523 = vunpack.c.h.b16 %v428
    %v524 = vunpack.c.l.b16 %v429
    %v525 = vunpack.c.h.b16 %v429
    %v526 = vunpack.c.l.b16 %v430
    %v527 = vunpack.c.h.b16 %v430
    %v528 = vunpack.c.l.b16 %v431
    %v529 = vunpack.c.h.b16 %v431
    %v530 = vunpack.c.l.b16 %v432
    %v531 = vunpack.c.h.b16 %v432
    %v532 = vunpack.c.l.b16 %v433
    %v533 = vunpack.c.h.b16 %v433
    %v534 = vunpack.c.l.b16 %v434
    %v535 = vunpack.c.h.b16 %v434
    %v536 = vunpack.c.l.b16 %v435
    %v537 = vunpack.c.h.b16 %v435
    %v538 = vpack.c.b16 %v476, %v474
    %v539 = vpack.c.b16 %v477, %v475
    %v540 = vpack.c.b16 %v480, %v478
    %v541 = vpack.c.b16 %v481, %v479
    %v542 = vpack.c.b16 %v484, %v482
    %v543 = vpack.c.b16 %v485, %v483
    %v544 = vpack.c.b16 %v488, %v486
    %v545 = vpack.c.b16 %v489, %v487
    %v546 = vpack.c.b16 %v492, %v490
    %v547 = vpack.c.b16 %v493, %v491
    %v548 = vpack.c.b16 %v496, %v494
    %v549 = vpack.c.b16 %v497, %v495
    %v550 = vpack.c.b16 %v500, %v498
    %v551 = vpack.c.b16 %v501, %v499
    %v552 = vpack.c.b16 %v504, %v502
    %v553 = vpack.c.b16 %v505, %v503
    %v554 = vpack.c.b16 %v508, %v506
    %v555 = vpack.c.b16 %v509, %v507
    %v556 = vpack.c.b16 %v512, %v510
    %v557 = vpack.c.b16 %v513, %v511
    %v558 = vpack.c.b16 %v516, %v514
    %v559 = vpack.c.b16 %v517, %v515
    %v560 = vpack.c.b16 %v520, %v518
    %v561 = vpack.c.b16 %v521, %v519
    %v562 = vpack.c.b16 %v524, %v522
    %v563 = vpack.c.b16 %v525, %v523
    %v564 = vpack.c.b16 %v528, %v526
    %v565 = vpack.c.b16 %v529, %v527
    %v566 = vpack.c.b16 %v532, %v530
    %v567 = vpack.c.b16 %v533, %v531
    %v568 = vpack.c.b16 %v536, %v534
    %v569 = vpack.c.b16 %v537, %v535
    %602 = vmatpush.bf16.msra.mxu0 %v552
    %603 = vmatpush.bf16.msra.mxu0 %v550
    %604 = vmatpush.bf16.msra.mxu0 %v548
    %605 = vmatpush.bf16.msra.mxu0 %v546
    %606 = vmatpush.bf16.msra.mxu0 %v544
    %607 = vmatpush.bf16.msra.mxu0 %v542
    %608 = vmatpush.bf16.msra.mxu0 %v540
    %609 = vmatpush.bf16.msra.mxu0 %v538
    %610 = vmatmul.bf16.gmra.mxu0 %v402
    %v611 = vpop.f32.mrf.mxu0
    %v612 = vadd.f32 %v438, %v611
    %v613 = vpop.f32.mrf.mxu0
    %614 = vdwg.mxu0
    %615 = vmatpush.bf16.msra.mxu0 %v568
    %616 = vmatpush.bf16.msra.mxu0 %v566
    %617 = vmatpush.bf16.msra.mxu0 %v564
    %618 = vmatpush.bf16.msra.mxu0 %v562
    %619 = vmatpush.bf16.msra.mxu0 %v560
    %620 = vmatpush.bf16.msra.mxu0 %v558
    %621 = vmatpush.bf16.msra.mxu0 %v556
    %622 = vmatpush.bf16.msra.mxu0 %v554
    %623 = vmatmul.bf16.gmra.mxu0 %v403
    %v624 = vpop.f32.mrf.mxu0
    %v625 = vadd.f32 %v612, %v624
    %v626 = vpop.f32.mrf.mxu0
    %627 = vdwg.mxu0
    %628 = vmatpush.bf16.msra.mxu0 %v553
    %629 = vmatpush.bf16.msra.mxu0 %v551
    %630 = vmatpush.bf16.msra.mxu0 %v549
    %631 = vmatpush.bf16.msra.mxu0 %v547
    %632 = vmatpush.bf16.msra.mxu0 %v545
    %633 = vmatpush.bf16.msra.mxu0 %v543
    %634 = vmatpush.bf16.msra.mxu0 %v541
    %635 = vmatpush.bf16.msra.mxu0 %v539
    %636 = vmatmul.bf16.gmra.mxu0 %v402
    %v637 = vpop.f32.mrf.mxu0
    %v638 = vadd.f32 %v439, %v637
    %v639 = vpop.f32.mrf.mxu0
    %640 = vdwg.mxu0
    %641 = vmatpush.bf16.msra.mxu0 %v569
    %642 = vmatpush.bf16.msra.mxu0 %v567
    %643 = vmatpush.bf16.msra.mxu0 %v565
    %644 = vmatpush.bf16.msra.mxu0 %v563
    %645 = vmatpush.bf16.msra.mxu0 %v561
    %646 = vmatpush.bf16.msra.mxu0 %v559
    %647 = vmatpush.bf16.msra.mxu0 %v557
    %648 = vmatpush.bf16.msra.mxu0 %v555
    %649 = vmatmul.bf16.gmra.mxu0 %v403
    %v650 = vpop.f32.mrf.mxu0
    %v651 = vadd.f32 %v638, %v650
    %v652 = vpop.f32.mrf.mxu0
    %653 = vdwg.mxu0
    %v654 = vmax.f32 %v625, 0.0
    %v655 = vmax.f32 %v651, 0.0
    %v656 = vpack.c.bf16 %v654, %v654
    %v657 = vpack.c.bf16 %v655, %v655
    %v658 = vld [vmem:[#allocation7] sm:$0xf]
    %v659 = vld [vmem:[#allocation7 + $0x4] sm:$0xf]
    %v660 = vld [vmem:[#allocation7 + $0x8] sm:$0xf]
    %v661 = vld [vmem:[#allocation7 + $0xc] sm:$0xf]
    %v662 = vld [vmem:[#allocation7 + $0x10] sm:$0xf]
    %v663 = vld [vmem:[#allocation7 + $0x14] sm:$0xf]
    %v664 = vld [vmem:[#allocation7 + $0x18] sm:$0xf]
    %v665 = vld [vmem:[#allocation7 + $0x1c] sm:$0xf]
    %v666 = vld [vmem:[#allocation7 + $0x20] sm:$0xf]
    %v667 = vld [vmem:[#allocation7 + $0x24] sm:$0xf]
    %v668 = vld [vmem:[#allocation7 + $0x28] sm:$0xf]
    %v669 = vld [vmem:[#allocation7 + $0x2c] sm:$0xf]
    %v670 = vld [vmem:[#allocation7 + $0x30] sm:$0xf]
    %v671 = vld [vmem:[#allocation7 + $0x34] sm:$0xf]
    %v672 = vld [vmem:[#allocation7 + $0x38] sm:$0xf]
    %v673 = vld [vmem:[#allocation7 + $0x3c] sm:$0xf]
    %v674 = vld [vmem:[#allocation7 + $0x40] sm:$0xf]
    %v675 = vld [vmem:[#allocation7 + $0x44] sm:$0xf]
    %v676 = vld [vmem:[#allocation7 + $0x48] sm:$0xf]
    %v677 = vld [vmem:[#allocation7 + $0x4c] sm:$0xf]
    %v678 = vld [vmem:[#allocation7 + $0x50] sm:$0xf]
    %v679 = vld [vmem:[#allocation7 + $0x54] sm:$0xf]
    %v680 = vld [vmem:[#allocation7 + $0x58] sm:$0xf]
    %v681 = vld [vmem:[#allocation7 + $0x5c] sm:$0xf]
    %v682 = vld [vmem:[#allocation7 + $0x60] sm:$0xf]
    %v683 = vld [vmem:[#allocation7 + $0x64] sm:$0xf]
    %v684 = vld [vmem:[#allocation7 + $0x68] sm:$0xf]
    %v685 = vld [vmem:[#allocation7 + $0x6c] sm:$0xf]
    %v686 = vld [vmem:[#allocation7 + $0x70] sm:$0xf]
    %v687 = vld [vmem:[#allocation7 + $0x74] sm:$0xf]
    %v688 = vld [vmem:[#allocation7 + $0x78] sm:$0xf]
    %v689 = vld [vmem:[#allocation7 + $0x7c] sm:$0xf]
    %v690 = vld [vmem:[%s8] sm:$0x1]
    %v692 = vperm.slane %v690, 0
    %v726 = vunpack.c.l.b16 %v658
    %v727 = vunpack.c.l.b16 %v659
    %v728 = vunpack.c.l.b16 %v660
    %v729 = vunpack.c.l.b16 %v661
    %v730 = vunpack.c.l.b16 %v662
    %v731 = vunpack.c.l.b16 %v663
    %v732 = vunpack.c.l.b16 %v664
    %v733 = vunpack.c.l.b16 %v665
    %v734 = vunpack.c.l.b16 %v666
    %v735 = vunpack.c.l.b16 %v667
    %v736 = vunpack.c.l.b16 %v668
    %v737 = vunpack.c.l.b16 %v669
    %v738 = vunpack.c.l.b16 %v670
    %v739 = vunpack.c.l.b16 %v671
    %v740 = vunpack.c.l.b16 %v672
    %v741 = vunpack.c.l.b16 %v673
    %v742 = vunpack.c.l.b16 %v674
    %v743 = vunpack.c.l.b16 %v675
    %v744 = vunpack.c.l.b16 %v676
    %v745 = vunpack.c.l.b16 %v677
    %v746 = vunpack.c.l.b16 %v678
    %v747 = vunpack.c.l.b16 %v679
    %v748 = vunpack.c.l.b16 %v680
    %v749 = vunpack.c.l.b16 %v681
    %v750 = vunpack.c.l.b16 %v682
    %v751 = vunpack.c.l.b16 %v683
    %v752 = vunpack.c.l.b16 %v684
    %v753 = vunpack.c.l.b16 %v685
    %v754 = vunpack.c.l.b16 %v686
    %v755 = vunpack.c.l.b16 %v687
    %v756 = vunpack.c.l.b16 %v688
    %v757 = vunpack.c.l.b16 %v689
    %v758 = vpack.c.b16 %v727, %v726
    %v759 = vpack.c.b16 %v729, %v728
    %v760 = vpack.c.b16 %v731, %v730
    %v761 = vpack.c.b16 %v733, %v732
    %v762 = vpack.c.b16 %v735, %v734
    %v763 = vpack.c.b16 %v737, %v736
    %v764 = vpack.c.b16 %v739, %v738
    %v765 = vpack.c.b16 %v741, %v740
    %v766 = vpack.c.b16 %v743, %v742
    %v767 = vpack.c.b16 %v745, %v744
    %v768 = vpack.c.b16 %v747, %v746
    %v769 = vpack.c.b16 %v749, %v748
    %v770 = vpack.c.b16 %v751, %v750
    %v771 = vpack.c.b16 %v753, %v752
    %v772 = vpack.c.b16 %v755, %v754
    %v773 = vpack.c.b16 %v757, %v756
    %790 = vmatpush.bf16.msra.mxu0 %v765
    %791 = vmatpush.bf16.msra.mxu0 %v764
    %792 = vmatpush.bf16.msra.mxu0 %v763
    %793 = vmatpush.bf16.msra.mxu0 %v762
    %794 = vmatpush.bf16.msra.mxu0 %v761
    %795 = vmatpush.bf16.msra.mxu0 %v760
    %796 = vmatpush.bf16.msra.mxu0 %v759
    %797 = vmatpush.bf16.msra.mxu0 %v758
    %798 = vmatmul.bf16.gmra.mxu0 %v656
    %v799 = vpop.f32.mrf.mxu0
    %v800 = vadd.f32 %v692, %v799
    %v801 = vpop.f32.mrf.mxu0
    %802 = vdwg.mxu0
    %803 = vmatpush.bf16.msra.mxu0 %v773
    %804 = vmatpush.bf16.msra.mxu0 %v772
    %805 = vmatpush.bf16.msra.mxu0 %v771
    %806 = vmatpush.bf16.msra.mxu0 %v770
    %807 = vmatpush.bf16.msra.mxu0 %v769
    %808 = vmatpush.bf16.msra.mxu0 %v768
    %809 = vmatpush.bf16.msra.mxu0 %v767
    %810 = vmatpush.bf16.msra.mxu0 %v766
    %811 = vmatmul.bf16.gmra.mxu0 %v657
    %v812 = vpop.f32.mrf.mxu0
    %v813 = vadd.f32 %v800, %v812
    %v814 = vpop.f32.mrf.mxu0
    %815 = vdwg.mxu0
    %v816 = vmax.f32 %v813, 0.0
    %v817 = vlaneseq
    %v818 = vand.u32 %v817, 127
    %vm819 = vcmp.lt.s32.totalorder %v818, 104
    %v820 = vsel %vm819, 1, 0
    %v821 = vcvt.s32.f32 %v820
    %822 = vmax.xlane.f32.xlu0 %v816
    %v823 = vpop.xlane.xlu0 %822
    %v824 = vsub.f32 %v816, %v823
    %v825 = vmul.f32 %v824, 1.442695
    %v826 = vpow.pop %v825
    %v827 = vmul.f32 %v826, %v821
    %828 = vadd.xlane.f32.xlu0 %v827
    %v829 = vpop.xlane.xlu0 %828
    %v830 = vrcp.pop %v829
    %v831 = vmul.f32 %v827, %v830
    %832 = vst [vmem:[#allocation8] sm:$0xff] %v831
    // Predicated region
    $region50: #{tpu_custom_call.1} parent=1 // pred_check
      _
    $region51: #{tpu_custom_call.1} parent=1 // pred_check_branch
      %834 = sbr.rel (0) target = $region53
    $region52: #{tpu_custom_call.1} parent=1 // pred_region
      %836 = vsyncadd [#allocation4], 0
      %s838 = sshll.u32 [#allocation8], 4
      %s839 = int_to_ptr.vmem [resolvable:$true] %s838
      %s840 = sshll.u32 %s9, 4
      %s841 = int_to_ptr.hbm [resolvable:$true] %s840
      %843 = dma.vmem_to_hbm [thread:$0]  %s839, 128, %s841, [#allocation4]
    $region53: #{tpu_custom_call.1} parent=1 // pred_fallthru
      _
    // Predicated region
    $region54: #{tpu_custom_call.1} parent=1 // pred_check
      _
    $region55: #{tpu_custom_call.1} parent=1 // pred_check_branch
      %845 = sbr.rel (0) target = $region57
    $region56: #{tpu_custom_call.1} parent=1 // pred_region
      %847 = dma.done [#allocation4], 128
    $region57: #{tpu_custom_call.1} parent=1 // pred_fallthru
      _
    %848 = vsyncpa [#allocation3], 1
    %849 = vsyncpa [#allocation6], 1
    %850 = vsyncpa [#allocation4], 1

</llo_original>
